<compile_context>
chip_gen: v6e
topology: v6e:2x2x1
jax: 0.10.0
libtpu: 0.0.40
codegen_flags: <defaults>
</compile_context>

<pallas_src>
import numpy as np
import jax
import jax.numpy as jnp
from jax.experimental import pallas as pl
from jax.experimental.pallas import tpu as pltpu

NUM_CLASSES = 66  # 0 = PAD, 1..64 = codons (AAA..TTT), 65 = GAP

# --- deterministic reconstruction of codon_prob_matrics (standard genetic code) -----------------
# TODO(synk): the module's PAD_RESTYPES_GAP / translation_map / start_map globals were not provided;
# reconstructed with the standard genetic code and use_start_codon=False (the module's default).
_BASES = "ACGT"
_CODONS = [a + b + c for a in _BASES for b in _BASES for c in _BASES]
_AA_TO_CODONS = {
    "A": ["GCT", "GCC", "GCA", "GCG"],
    "R": ["CGT", "CGC", "CGA", "CGG", "AGA", "AGG"],
    "N": ["AAT", "AAC"],
    "D": ["GAT", "GAC"],
    "C": ["TGT", "TGC"],
    "Q": ["CAA", "CAG"],
    "E": ["GAA", "GAG"],
    "G": ["GGT", "GGC", "GGA", "GGG"],
    "H": ["CAT", "CAC"],
    "I": ["ATT", "ATC", "ATA"],
    "L": ["TTA", "TTG", "CTT", "CTC", "CTA", "CTG"],
    "K": ["AAA", "AAG"],
    "M": ["ATG"],
    "F": ["TTT", "TTC"],
    "P": ["CCT", "CCC", "CCA", "CCG"],
    "S": ["TCT", "TCC", "TCA", "TCG", "AGT", "AGC"],
    "T": ["ACT", "ACC", "ACA", "ACG"],
    "W": ["TGG"],
    "Y": ["TAT", "TAC"],
    "V": ["GTT", "GTC", "GTA", "GTG"],
    "*": ["TAA", "TAG", "TGA"],
}
_TRANSLATION_MAP = {c: aa for aa, cs in _AA_TO_CODONS.items() for c in cs}
_PAD_RESTYPES_GAP = ["<pad>"] + _CODONS + ["-"]


def codon_prob_matrics_np(num_tokens: int = NUM_CLASSES) -> np.ndarray:
    """Row i = probability distribution over classes synonymous with class i (rows sum to 1)."""
    m = np.zeros((num_tokens, num_tokens), dtype=np.float32)
    for i in range(num_tokens):
        codon = _PAD_RESTYPES_GAP[i] if i < len(_PAD_RESTYPES_GAP) else ""
        aa = _TRANSLATION_MAP.get(codon)
        if aa is None:
            sim = [i]  # PAD / GAP / unknown -> identity row
        else:
            sim = [_PAD_RESTYPES_GAP.index(c) for c in _AA_TO_CODONS[aa]]
        m[i, sim] += 1.0 / len(sim)
    return m


# --- Pallas kernel -------------------------------------------------------------------------------
def ols_ce_kernel(n_ref, x_ref, tgt_ref, m_ref, out_ref):
    # n_ref:   (1,)      SMEM int32 -- number of valid rows N
    # x_ref:   (TM, C)   logits tile (rows = flattened (batch, seq))
    # tgt_ref: (TM, 1)   int32 codon class indices
    # m_ref:   (C, C)    codon-synonymy soft-label matrix (VMEM-resident)
    # out_ref: (1, 1, 1) per-core partial loss sum (mean divisor applied outside)
    i = pl.program_id(1)

    @pl.when(i == 0)
    def _():
        out_ref[...] = jnp.zeros_like(out_ref)

    x = x_ref[...]                                   # (TM, C) f32
    t = tgt_ref[...]                                 # (TM, 1) i32
    tm, num_c = x.shape

    # Row-validity mask built in-kernel from the grid position (no mask stream from HBM).
    tile_idx = pl.program_id(0) * pl.num_programs(1) + i
    row_ids = tile_idx * tm + jax.lax.broadcasted_iota(jnp.int32, (tm, 1), 0)
    mask = (row_ids < n_ref[0]).astype(jnp.float32)  # (TM, 1)

    # Soft labels: one-hot(target) gather of matrics rows via a small MXU matmul.
    onehot = (jax.lax.broadcasted_iota(jnp.int32, (tm, num_c), 1) == t).astype(jnp.float32)
    soft = jnp.dot(onehot, m_ref[...], preferred_element_type=jnp.float32)   # (TM, C)

    # Soft-label cross entropy per row: logsumexp(x) - <soft, x>
    row_max = jnp.max(x, axis=-1, keepdims=True)
    lse = row_max + jnp.log(jnp.sum(jnp.exp(x - row_max), axis=-1, keepdims=True))
    xdot = jnp.sum(soft * x, axis=-1, keepdims=True)
    out_ref[...] += jnp.sum((lse - xdot) * mask)


def ols_cross_entropy_loss(input_bcs, target_bs, matrics, tm=512, num_parallel=2):
    """input_bcs: (B, C, S) float logits; target_bs: (B, S) int codon classes; matrics: (C, C)."""
    B, C, S = input_bcs.shape
    N = B * S
    x = jnp.transpose(input_bcs, (0, 2, 1)).reshape(N, C).astype(jnp.float32)
    tgt = target_bs.reshape(N, 1).astype(jnp.int32)

    # Large row tiles (sublane-aligned); don't over-pad tiny problems.
    tm = min(tm, max(8, -(-N // 8) * 8))
    tiles = -(-N // tm)
    p = num_parallel if tiles >= num_parallel else 1          # megacore split (v7x); serial elsewhere
    tiles_per_core = -(-tiles // p)
    n_pad = p * tiles_per_core * tm
    pad = n_pad - N

    x_p = jnp.pad(x, ((0, pad), (0, 0)))
    t_p = jnp.pad(tgt, ((0, pad), (0, 0)))
    n_arr = jnp.asarray([N], jnp.int32)
    m_arr = jnp.asarray(matrics, jnp.float32)

    out = pl.pallas_call(
        ols_ce_kernel,
        out_shape=jax.ShapeDtypeStruct((p, 1, 1), jnp.float32),
        grid=(p, tiles_per_core),
        in_specs=[
            pl.BlockSpec(memory_space=pltpu.MemorySpace.SMEM),                  # N scalar
            pl.BlockSpec((tm, C), lambda c, i: (c * tiles_per_core + i, 0)),    # logits tile
            pl.BlockSpec((tm, 1), lambda c, i: (c * tiles_per_core + i, 0)),    # int targets
            pl.BlockSpec((C, C), lambda c, i: (0, 0)),                          # resident matrix
        ],
        out_specs=pl.BlockSpec((1, 1, 1), lambda c, i: (c, 0, 0)),
        compiler_params=pltpu.CompilerParams(
            dimension_semantics=("parallel", "arbitrary")),
    )(n_arr, x_p, t_p, m_arr)
    # cross_entropy(reduction='mean') with probability targets: mean over B*S positions.
    return jnp.sum(out) / N


# --- pure-JAX reference replicating the PyTorch forward ------------------------------------------
def ref_ols_cross_entropy_loss(input_bcs, target_bs, matrics):
    B, C, S = input_bcs.shape
    x = jnp.transpose(input_bcs, (0, 2, 1)).reshape(B * S, C).astype(jnp.float32)
    t = target_bs.reshape(B * S)
    soft = jnp.asarray(matrics, jnp.float32)[t]                # (N, C) soft labels
    logp = jax.nn.log_softmax(x, axis=-1)
    return -jnp.mean(jnp.sum(soft * logp, axis=-1))


if __name__ == "__main__":
    key = jax.random.PRNGKey(0)
    kx, kt = jax.random.split(key)

    B, C, S = 2, NUM_CLASSES, 16
    matrics = codon_prob_matrics_np(C)

    x = jax.random.normal(kx, (B, C, S), dtype=jnp.float32)          # logits, NCL like PyTorch
    target = jax.random.randint(kt, (B, S), 0, C, dtype=jnp.int32)   # codon class indices

    loss = ols_cross_entropy_loss(x, target, matrics)
    loss = jax.block_until_ready(loss)

    ref = jax.block_until_ready(ref_ols_cross_entropy_loss(x, target, matrics))
    np.testing.assert_allclose(np.asarray(loss), np.asarray(ref), rtol=1e-5, atol=1e-5)

    print("KERNEL_OK")
</pallas_src>

<mosaic_0001>
module attributes {stable_mosaic.version = 11 : i64} {
  func.func @ols_ce_kernel(%arg0: i32, %arg1: i32, %arg2: memref<1xi32, #tpu.memory_space<smem>>, %arg3: memref<32x66xf32, #tpu.memory_space<vmem>>, %arg4: memref<32x1xi32, #tpu.memory_space<vmem>>, %arg5: memref<66x66xf32, #tpu.memory_space<vmem>>, %arg6: memref<1x1x1xf32, #tpu.memory_space<vmem>>) attributes {dimension_semantics = [#tpu.dimension_semantics<parallel>, #tpu.dimension_semantics<arbitrary>], iteration_bounds = array<i64: 1, 1>, scalar_prefetch = 0 : i64, scratch_operands = 0 : i64, tpu.core_type = #tpu.core_type<tc>, window_params = [{transform_indices = @transform_0, window_bounds = array<i64: 1>}, {transform_indices = @transform_1, window_bounds = array<i64: 32, 66>}, {transform_indices = @transform_2, window_bounds = array<i64: 32, 1>}, {pipeline_mode = #tpu.pipeline_mode<synchronous>, transform_indices = @transform_3, window_bounds = array<i64: 66, 66>}, {transform_indices = @transform_4, window_bounds = array<i64: 1, 1, 1>}]} {
    %c0_i32 = arith.constant 0 : i32
    %0 = arith.cmpi eq, %arg1, %c0_i32 : i32
    %1 = arith.extui %0 : i1 to i32
    %c0_i32_0 = arith.constant 0 : i32
    %2 = arith.cmpi ne, %1, %c0_i32_0 : i32
    scf.if %2 {
      %cst_17 = arith.constant 0.000000e+00 : f32
      %45 = vector.broadcast %cst_17 : f32 to vector<1x1x1xf32>
      %c0_18 = arith.constant 0 : index
      %c0_19 = arith.constant 0 : index
      %c0_20 = arith.constant 0 : index
      %46 = vector.load %arg6[%c0_18, %c0_19, %c0_20] : memref<1x1x1xf32, #tpu.memory_space<vmem>>, vector<1x1x1xf32>
      tpu.vector_store %arg6[%c0_18, %c0_19, %c0_20], %45 {strides = array<i32>} : memref<1x1x1xf32, #tpu.memory_space<vmem>>, vector<1x1x1xf32>,
    } else {
    }
    %c0 = arith.constant 0 : index
    %c0_1 = arith.constant 0 : index
    %3 = vector.load %arg3[%c0, %c0_1] : memref<32x66xf32, #tpu.memory_space<vmem>>, vector<32x66xf32>
    %c0_2 = arith.constant 0 : index
    %c0_3 = arith.constant 0 : index
    %4 = vector.load %arg4[%c0_2, %c0_3] : memref<32x1xi32, #tpu.memory_space<vmem>>, vector<32x1xi32>
    %c1_i32 = arith.constant 1 : i32
    %5 = arith.muli %arg0, %c1_i32 : i32
    %6 = arith.addi %5, %arg1 : i32
    %c32_i32 = arith.constant 32 : i32
    %7 = arith.muli %6, %c32_i32 : i32
    %8 = tpu.iota {dimensions = array<i32: 0>} : vector<32x1xi32>
    %9 = vector.broadcast %7 : i32 to vector<32x1xi32>
    %10 = arith.addi %9, %8 : vector<32x1xi32>
    %c0_4 = arith.constant 0 : index
    %11 = memref.load %arg2[%c0_4] : memref<1xi32, #tpu.memory_space<smem>>
    %12 = vector.broadcast %11 : i32 to vector<32x1xi32>
    %13 = arith.cmpi slt, %10, %12 : vector<32x1xi32>
    %14 = arith.extui %13 : vector<32x1xi1> to vector<32x1xi32>
    %15 = arith.sitofp %14 : vector<32x1xi32> to vector<32x1xf32>
    %16 = tpu.iota {dimensions = array<i32: 1>} : vector<32x66xi32>
    %17 = vector.broadcast %4 : vector<32x1xi32> to vector<32x66xi32>
    %18 = arith.cmpi eq, %16, %17 : vector<32x66xi32>
    %19 = arith.extui %18 : vector<32x66xi1> to vector<32x66xi32>
    %20 = arith.sitofp %19 : vector<32x66xi32> to vector<32x66xf32>
    %c0_5 = arith.constant 0 : index
    %c0_6 = arith.constant 0 : index
    %21 = vector.load %arg5[%c0_5, %c0_6] : memref<66x66xf32, #tpu.memory_space<vmem>>, vector<66x66xf32>
    %cst = arith.constant dense<0.000000e+00> : vector<32x66xf32>
    %22 = tpu.matmul %20, %21, %cst {dimension_numbers = #tpu.dot_dimension_numbers<[1], [0], [0], [1], [0, 0, 1, 1], [], []>} : vector<32x66xf32>, vector<66x66xf32>, vector<32x66xf32> -> vector<32x66xf32>
    %cst_7 = arith.constant dense<0xFF800000> : vector<32xf32>
    %23 = vector.multi_reduction <maximumf>, %3, %cst_7 [1] : vector<32x66xf32> to vector<32xf32>
    %24 = vector.shape_cast %23 : vector<32xf32> to vector<32x1xf32>
    %25 = vector.broadcast %24 : vector<32x1xf32> to vector<32x66xf32>
    %26 = arith.subf %3, %25 : vector<32x66xf32>
    %27 = math.exp %26 : vector<32x66xf32>
    %cst_8 = arith.constant dense<0.000000e+00> : vector<32xf32>
    %28 = vector.multi_reduction <add>, %27, %cst_8 [1] : vector<32x66xf32> to vector<32xf32>
    %29 = vector.shape_cast %28 : vector<32xf32> to vector<32x1xf32>
    %30 = math.log %29 : vector<32x1xf32>
    %31 = arith.addf %24, %30 : vector<32x1xf32>
    %32 = arith.mulf %22, %3 : vector<32x66xf32>
    %cst_9 = arith.constant dense<0.000000e+00> : vector<32xf32>
    %33 = vector.multi_reduction <add>, %32, %cst_9 [1] : vector<32x66xf32> to vector<32xf32>
    %34 = vector.shape_cast %33 : vector<32xf32> to vector<32x1xf32>
    %c0_10 = arith.constant 0 : index
    %c0_11 = arith.constant 0 : index
    %c0_12 = arith.constant 0 : index
    %35 = vector.load %arg6[%c0_10, %c0_11, %c0_12] : memref<1x1x1xf32, #tpu.memory_space<vmem>>, vector<1x1x1xf32>
    %36 = arith.subf %31, %34 : vector<32x1xf32>
    %37 = arith.mulf %36, %15 : vector<32x1xf32>
    %38 = vector.shape_cast %37 : vector<32x1xf32> to vector<1x32x1xf32>
    %cst_13 = arith.constant dense<0.000000e+00> : vector<1xf32>
    %39 = vector.multi_reduction <add>, %38, %cst_13 [1, 2] : vector<1x32x1xf32> to vector<1xf32>
    %40 = vector.shape_cast %39 : vector<1xf32> to vector<1x1x1xf32>
    %41 = vector.extract %40[0, 0, 0] : f32 from vector<1x1x1xf32>
    %42 = vector.broadcast %41 : f32 to vector<1x1x1xf32>
    %43 = arith.addf %35, %42 : vector<1x1x1xf32>
    %c0_14 = arith.constant 0 : index
    %c0_15 = arith.constant 0 : index
    %c0_16 = arith.constant 0 : index
    %44 = vector.load %arg6[%c0_14, %c0_15, %c0_16] : memref<1x1x1xf32, #tpu.memory_space<vmem>>, vector<1x1x1xf32>
    tpu.vector_store %arg6[%c0_14, %c0_15, %c0_16], %43 {strides = array<i32>} : memref<1x1x1xf32, #tpu.memory_space<vmem>>, vector<1x1x1xf32>,
    return
  }
  func.func @transform_0(%arg0: i32, %arg1: i32) -> i32 {
    %c0_i32 = arith.constant 0 : i32
    %c0_i32_0 = arith.constant 0 : i32
    return %c0_i32 : i32
  }
  func.func @transform_1(%arg0: i32, %arg1: i32) -> (i32, i32) {
    %c1_i32 = arith.constant 1 : i32
    %0 = arith.muli %arg0, %c1_i32 : i32
    %1 = arith.addi %0, %arg1 : i32
    %c0_i32 = arith.constant 0 : i32
    %c0_i32_0 = arith.constant 0 : i32
    return %1, %c0_i32 : i32, i32
  }
  func.func @transform_2(%arg0: i32, %arg1: i32) -> (i32, i32) {
    %c1_i32 = arith.constant 1 : i32
    %0 = arith.muli %arg0, %c1_i32 : i32
    %1 = arith.addi %0, %arg1 : i32
    %c0_i32 = arith.constant 0 : i32
    %c0_i32_0 = arith.constant 0 : i32
    return %1, %c0_i32 : i32, i32
  }
  func.func @transform_3(%arg0: i32, %arg1: i32) -> (i32, i32) {
    %c0_i32 = arith.constant 0 : i32
    %c0_i32_0 = arith.constant 0 : i32
    %c0_i32_1 = arith.constant 0 : i32
    return %c0_i32, %c0_i32_0 : i32, i32
  }
  func.func @transform_4(%arg0: i32, %arg1: i32) -> (i32, i32, i32) {
    %c0_i32 = arith.constant 0 : i32
    %c0_i32_0 = arith.constant 0 : i32
    %c0_i32_1 = arith.constant 0 : i32
    return %arg0, %c0_i32, %c0_i32_0 : i32, i32, i32
  }
}

</mosaic_0001>

<llo_original>
// kernel: tpu_custom_call.1
$region0: #{tpu_custom_call.1}
  #allocation0 [shape = 'u32[]', space=smem, size = 0x4, offset = 0x4, fixed_abs, tag = 'smem constant byte address 0x4 - core index']
  #allocation1 [shape = 'u32[144,128]{1,0:T(1,128)}', space=vmem, size = 0x12000, scoped, tag = 'internal scratch']
  #allocation2 [shape = 's32[1]{0:T(128)S(6)}', space=smem, size = 0x200, scoped, tag = 'scoped memory for tpu_custom_call.1']
  %s0 = inlined_call_operand.<no memory space> [shape: s32[1], index: 0, kind: input, shape index: {}]
  %s1 = inlined_call_operand.vmem [shape: f32[32,66], index: 1, kind: input, shape index: {}]
  %s2 = inlined_call_operand.vmem [shape: s32[32,1], index: 2, kind: input, shape index: {}]
  %s3 = inlined_call_operand.hbm [shape: f32[66,66], index: 3, kind: input, shape index: {}]
  %s4 = inlined_call_operand.hbm [shape: f32[1,1,1], index: 4, kind: output, shape index: {}]
  %s5 = sld [smem:[#allocation0]]
  $region34: #{tpu_custom_call.1} parent=0
    _
  %s7 = ssub.s32 1, %s5
  %s8 = scalar_select 0, %s7, %s5
  %9 = sst [smem:[#allocation2]] %s0
  $region1: #{tpu_custom_call.1} parent=0
    #allocation3 [shape = 'u8[36864]{0}', space=vmem, size = 0x9000, scoped, tag = 'input window, operand 3, single buffered']
    #allocation4 [shape = 's32[1]{0}', space=sflag, size = 0x4, scoped, tag = 'scoped memory for tpu_custom_call.1']
    #allocation5 [shape = 's32[1]{0}', space=sflag, size = 0x4, scoped, tag = 'scoped memory for tpu_custom_call.1']
    #allocation6 [shape = 'u8[512]{0}', space=vmem, size = 0x400, scoped, tag = 'output window, operand 0, single buffered']
    %10 = vsyncpa [#allocation4], 0
    %11 = vsyncpa [#allocation5], 0
    // Predicated region
    $region2: #{tpu_custom_call.1} parent=1 // pred_check
      _
    $region3: #{tpu_custom_call.1} parent=1 // pred_check_branch
      %13 = sbr.rel (0) target = $region5
    $region4: #{tpu_custom_call.1} parent=1 // pred_region
      _
    $region5: #{tpu_custom_call.1} parent=1 // pred_fallthru
      _
    // Predicated region
    $region6: #{tpu_custom_call.1} parent=1 // pred_check
      _
    $region7: #{tpu_custom_call.1} parent=1 // pred_check_branch
      %15 = sbr.rel (0) target = $region9
    $region8: #{tpu_custom_call.1} parent=1 // pred_region
      %s16 = sadd.s32 0, 0
      %s17 = smul.u32 4, %s16
      %p18 = scmp.lt.s32.totalorder %s17, 3
      %s19 = scalar_select %p18, %s17, 3
      %s20 = smul.addr %s19, 8
      %s21 = scalar_lea.vmem %s1, %s20
      %s22 = sadd.s32 0, 0
      %s23 = smul.u32 4, %s22
    $region9: #{tpu_custom_call.1} parent=1 // pred_fallthru
      _
    // Predicated region
    $region10: #{tpu_custom_call.1} parent=1 // pred_check
      _
    $region11: #{tpu_custom_call.1} parent=1 // pred_check_branch
      %25 = sbr.rel (0) target = $region13
    $region12: #{tpu_custom_call.1} parent=1 // pred_region
      %s26 = sadd.s32 0, 0
      %s27 = smul.u32 4, %s26
      %p28 = scmp.lt.s32.totalorder %s27, 3
      %s29 = scalar_select %p28, %s27, 3
      %s30 = smul.addr %s29, 8
      %s31 = scalar_lea.vmem %s2, %s30
      %s32 = sadd.s32 0, 0
      %s33 = smul.u32 4, %s32
    $region13: #{tpu_custom_call.1} parent=1 // pred_fallthru
      _
    // Predicated region
    $region14: #{tpu_custom_call.1} parent=1 // pred_check
      _
    $region15: #{tpu_custom_call.1} parent=1 // pred_check_branch
      %35 = sbr.rel (0) target = $region17
    $region16: #{tpu_custom_call.1} parent=1 // pred_region
      %s37 = ssub.s32 1152, 1152
      %38 = vsyncadd [#allocation4], %s37
      %s39 = sshll.u32 [#allocation3], 4
      %s40 = int_to_ptr.vmem [resolvable:$true] %s39
      %45 = dma.hbm_to_vmem [thread:$0]  %s3, 1152, %s40, [#allocation4], 128, 128, 8
    $region17: #{tpu_custom_call.1} parent=1 // pred_fallthru
      _
    // Predicated region
    $region18: #{tpu_custom_call.1} parent=1 // pred_check
      _
    $region19: #{tpu_custom_call.1} parent=1 // pred_check_branch
      %47 = sbr.rel (0) target = $region21
    $region20: #{tpu_custom_call.1} parent=1 // pred_region
      %48 = dma.done [#allocation4], 1152
    $region21: #{tpu_custom_call.1} parent=1 // pred_fallthru
      _
    %s49 = sadd.s32 0, 0
    %s50 = smul.u32 4, %s49
    %p51 = scmp.lt.s32.totalorder %s50, 3
    %s52 = scalar_select %p51, %s50, 3
    %s53 = smul.addr %s52, 8
    %s54 = scalar_lea.vmem %s1, %s53
    %s55 = sadd.s32 0, 0
    %s56 = smul.u32 4, %s55
    %p57 = scmp.lt.s32.totalorder %s56, 3
    %s58 = scalar_select %p57, %s56, 3
    %s59 = smul.addr %s58, 8
    %s60 = scalar_lea.vmem %s2, %s59
    %s61 = sadd.s32 0, 0
    %s62 = smul.u32 4, %s61
    %p63 = scmp.lt.s32.totalorder %s62, 3
    %s64 = scalar_select %p63, %s62, 3
    %s65 = smul.addr %s64, 8
    %s66 = scalar_lea.vmem %s1, %s65
    %s67 = sadd.s32 0, 0
    %s68 = smul.u32 4, %s67
    %s69 = sadd.s32 0, 0
    %s70 = smul.u32 4, %s69
    %p71 = scmp.lt.s32.totalorder %s70, 3
    %s72 = scalar_select %p71, %s70, 3
    %s73 = smul.addr %s72, 8
    %s74 = scalar_lea.vmem %s2, %s73
    %s75 = sadd.s32 0, 0
    %s76 = smul.u32 4, %s75
    %p77 = scmp.eq.s32.totalorder 0, 0
    // Predicated region
    $region22: #{tpu_custom_call.1} parent=1 // pred_check
      %p78 = pneg %p77
    $region23: #{tpu_custom_call.1} parent=1 // pred_check_branch
      %80 = sbr.rel (%p78) target = $region25
    $region24: #{tpu_custom_call.1} parent=1 // pred_region
      %vm81 = vcmask 0
      %82 = vst.msk [vmem:[#allocation6] sm:$0x1] %vm81, 0.0
    $region25: #{tpu_custom_call.1} parent=1 // pred_fallthru
      _
    %v83 = vld [vmem:[%s66] sm:$0xff]
    %v84 = vld [vmem:[%s66 + $0x8] sm:$0xff]
    %v85 = vld [vmem:[%s66 + $0x10] sm:$0xff]
    %v86 = vld [vmem:[%s66 + $0x18] sm:$0xff]
    %v87 = vld [vmem:[%s74] sm:$0xff]
    %v88 = vld [vmem:[%s74 + $0x8] sm:$0xff]
    %v89 = vld [vmem:[%s74 + $0x10] sm:$0xff]
    %v90 = vld [vmem:[%s74 + $0x18] sm:$0xff]
    %s91 = sadd.s32 0, 0
    %s92 = smul.u32 %s91, 32
    %v93 = vlaneseq
    %v94 = vshrl.u32 %v93, 7
    %v95 = vadd.s32 %v94, 8
    %v96 = vadd.s32 %v94, 16
    %v97 = vadd.s32 %v94, 24
    %v98 = vstv %s92
    %v99 = vadd.s32 %v98, %v94
    %v100 = vadd.s32 %v98, %v95
    %v101 = vadd.s32 %v98, %v96
    %v102 = vadd.s32 %v98, %v97
    %s103 = sld [smem:[#allocation2]]
    %v104 = vstv %s103
    %vm105 = vcmp.lt.s32.totalorder %v99, %v104
    %vm106 = vcmp.lt.s32.totalorder %v100, %v104
    %vm107 = vcmp.lt.s32.totalorder %v101, %v104
    %vm108 = vcmp.lt.s32.totalorder %v102, %v104
    %v109 = vsel %vm105, 1, 0
    %v110 = vsel %vm106, 1, 0
    %v111 = vsel %vm107, 1, 0
    %v112 = vsel %vm108, 1, 0
    %v113 = vcvt.s32.f32 %v109
    %v114 = vcvt.s32.f32 %v110
    %v115 = vcvt.s32.f32 %v111
    %v116 = vcvt.s32.f32 %v112
    %v117 = vlaneseq
    %v118 = vand.u32 %v117, 127
    %119 = vset.pattern.permute.xlu0 0
    %120 = vperm.xlu0 %119, %v87
    %v121 = vpop.permute.xlu0 %120
    %122 = vset.pattern.permute.xlu0 0
    %123 = vperm.xlu0 %122, %v88
    %v124 = vpop.permute.xlu0 %123
    %125 = vset.pattern.permute.xlu0 0
    %126 = vperm.xlu0 %125, %v89
    %v127 = vpop.permute.xlu0 %126
    %128 = vset.pattern.permute.xlu0 0
    %129 = vperm.xlu0 %128, %v90
    %v130 = vpop.permute.xlu0 %129
    %vm131 = vcmp.eq.s32.totalorder %v118, %v121
    %vm132 = vcmp.eq.s32.totalorder %v118, %v124
    %vm133 = vcmp.eq.s32.totalorder %v118, %v127
    %vm134 = vcmp.eq.s32.totalorder %v118, %v130
    %v135 = vsel %vm131, 1, 0
    %v136 = vsel %vm132, 1, 0
    %v137 = vsel %vm133, 1, 0
    %v138 = vsel %vm134, 1, 0
    %v139 = vcvt.s32.f32 %v135
    %v140 = vcvt.s32.f32 %v136
    %v141 = vcvt.s32.f32 %v137
    %v142 = vcvt.s32.f32 %v138
    %v143 = vld [vmem:[#allocation3] sm:$0xff]
    %v144 = vld [vmem:[#allocation3 + $0x8] sm:$0xff]
    %v145 = vld [vmem:[#allocation3 + $0x10] sm:$0xff]
    %v146 = vld [vmem:[#allocation3 + $0x18] sm:$0xff]
    %v147 = vld [vmem:[#allocation3 + $0x20] sm:$0xff]
    %v148 = vld [vmem:[#allocation3 + $0x28] sm:$0xff]
    %v149 = vld [vmem:[#allocation3 + $0x30] sm:$0xff]
    %v150 = vld [vmem:[#allocation3 + $0x38] sm:$0xff]
    %v151 = vld [vmem:[#allocation3 + $0x40] sm:$0x3]
    %vm152 = vcmask 539648
    %v154 = vsel %vm152, %v139, 0
    %v157 = vsel %vm152, %v140, 0
    %v160 = vsel %vm152, %v141, 0
    %v163 = vsel %vm152, %v142, 0
    %vm165 = vcmask 1041408
    %v167 = vsel %vm165, %v151, 0
    %169 = vmatprep.subr.mxu0 0.0
    %170 = vmatpush1.msra.mxu0 0.0
    %171 = vmatprep.subr.mxu0 0.0
    %172 = vmatpush1.msra.mxu0 0.0
    %173 = vmatprep.subr.mxu0 0.0
    %174 = vmatpush1.msra.mxu0 0.0
    %175 = vmatprep.subr.mxu0 0.0
    %176 = vmatpush1.msra.mxu0 0.0
    %177 = vmatprep.subr.mxu0 0.0
    %178 = vmatpush1.msra.mxu0 0.0
    %179 = vmatprep.subr.mxu0 0.0
    %180 = vmatpush1.msra.mxu0 0.0
    %181 = vmatprep.subr.mxu0 0.0
    %182 = vmatpush1.msra.mxu0 0.0
    %183 = vmatprep.subr.mxu0 0.0
    %184 = vmatpush1.msra.mxu0 %v167
    %185 = vmatprep.subr.mxu0 0.0
    %186 = vmatpush1.msra.mxu0 %v150
    %187 = vmatprep.subr.mxu0 0.0
    %188 = vmatpush1.msra.mxu0 %v149
    %189 = vmatprep.subr.mxu0 0.0
    %190 = vmatpush1.msra.mxu0 %v148
    %191 = vmatprep.subr.mxu0 0.0
    %192 = vmatpush1.msra.mxu0 %v147
    %193 = vmatprep.subr.mxu0 0.0
    %194 = vmatpush1.msra.mxu0 %v146
    %195 = vmatprep.subr.mxu0 0.0
    %196 = vmatpush1.msra.mxu0 %v145
    %197 = vmatprep.subr.mxu0 0.0
    %198 = vmatpush1.msra.mxu0 %v144
    %199 = vmatprep.subr.mxu0 0.0
    %200 = vmatpush1.msra.mxu0 %v143
    %201 = vmatprep.subr.mxu0 0.0
    %202 = vmatpush2.msra.mxu0 0.0
    %203 = vmatprep.subr.mxu0 0.0
    %204 = vmatpush2.msra.mxu0 0.0
    %205 = vmatprep.subr.mxu0 0.0
    %206 = vmatpush2.msra.mxu0 0.0
    %207 = vmatprep.subr.mxu0 0.0
    %208 = vmatpush2.msra.mxu0 0.0
    %209 = vmatprep.subr.mxu0 0.0
    %210 = vmatpush2.msra.mxu0 0.0
    %211 = vmatprep.subr.mxu0 0.0
    %212 = vmatpush2.msra.mxu0 0.0
    %213 = vmatprep.subr.mxu0 0.0
    %214 = vmatpush2.msra.mxu0 0.0
    %215 = vmatprep.subr.mxu0 0.0
    %216 = vmatpush2.msra.mxu0 0.0
    %217 = vmatprep.subr.mxu0 0.0
    %218 = vmatpush2.msra.mxu0 0.0
    %219 = vmatprep.subr.mxu0 0.0
    %220 = vmatpush2.msra.mxu0 0.0
    %221 = vmatprep.subr.mxu0 0.0
    %222 = vmatpush2.msra.mxu0 0.0
    %223 = vmatprep.subr.mxu0 0.0
    %224 = vmatpush2.msra.mxu0 0.0
    %225 = vmatprep.subr.mxu0 0.0
    %226 = vmatpush2.msra.mxu0 0.0
    %227 = vmatprep.subr.mxu0 0.0
    %228 = vmatpush2.msra.mxu0 0.0
    %229 = vmatprep.subr.mxu0 0.0
    %230 = vmatpush2.msra.mxu0 0.0
    %231 = vmatprep.subr.mxu0 0.0
    %232 = vmatpush2.msra.mxu0 0.0
    %233 = vmatprep.mubr.f32.mxu0 0.0
    %234 = vmatmul.mubr.f32.gmra.mxu0 %v154
    %v235 = vpop.f32.mrf.mxu0
    %v236 = vadd.f32 0.0, %v235
    %v237 = vpop.f32.mrf.mxu0
    %238 = vmatprep.mubr.f32.mxu0 0.0
    %239 = vmatmul.mubr.f32.gmra.mxu0 %v157
    %v240 = vpop.f32.mrf.mxu0
    %v241 = vadd.f32 0.0, %v240
    %v242 = vpop.f32.mrf.mxu0
    %243 = vmatprep.mubr.f32.mxu0 0.0
    %244 = vmatmul.mubr.f32.gmra.mxu0 %v160
    %v245 = vpop.f32.mrf.mxu0
    %v246 = vadd.f32 0.0, %v245
    %v247 = vpop.f32.mrf.mxu0
    %248 = vmatprep.mubr.f32.mxu0 0.0
    %249 = vmatmul.mubr.f32.gmra.mxu0 %v163
    %v250 = vpop.f32.mrf.mxu0
    %v251 = vadd.f32 0.0, %v250
    %v252 = vpop.f32.mrf.mxu0
    %253 = vdwg.mxu0
    %v254 = vsel %vm152, %v83, -inf
    %255 = vmax.xlane.f32.xlu0 %v254
    %v256 = vpop.xlane.xlu0 %255
    %v257 = vsel %vm152, %v84, -inf
    %258 = vmax.xlane.f32.xlu0 %v257
    %v259 = vpop.xlane.xlu0 %258
    %v260 = vsel %vm152, %v85, -inf
    %261 = vmax.xlane.f32.xlu0 %v260
    %v262 = vpop.xlane.xlu0 %261
    %v263 = vsel %vm152, %v86, -inf
    %264 = vmax.xlane.f32.xlu0 %v263
    %v265 = vpop.xlane.xlu0 %264
    %v266 = vsub.f32 %v83, %v256
    %v267 = vsub.f32 %v84, %v259
    %v268 = vsub.f32 %v85, %v262
    %v269 = vsub.f32 %v86, %v265
    %v270 = vmul.f32 %v266, 1.442695
    %v271 = vpow.pop %v270
    %v272 = vmul.f32 %v267, 1.442695
    %v273 = vpow.pop %v272
    %v274 = vmul.f32 %v268, 1.442695
    %v275 = vpow.pop %v274
    %v276 = vmul.f32 %v269, 1.442695
    %v277 = vpow.pop %v276
    %v278 = vsel %vm152, %v271, 0.0
    %279 = vadd.xlane.f32.xlu0 %v278
    %v280 = vpop.xlane.xlu0 %279
    %v281 = vsel %vm152, %v273, 0.0
    %282 = vadd.xlane.f32.xlu0 %v281
    %v283 = vpop.xlane.xlu0 %282
    %v284 = vsel %vm152, %v275, 0.0
    %285 = vadd.xlane.f32.xlu0 %v284
    %v286 = vpop.xlane.xlu0 %285
    %v287 = vsel %vm152, %v277, 0.0
    %288 = vadd.xlane.f32.xlu0 %v287
    %v289 = vpop.xlane.xlu0 %288
    %v290 = vlog2.pop %v280
    %v291 = vmul.f32 %v290, 0.6931472
    %v292 = vlog2.pop %v283
    %v293 = vmul.f32 %v292, 0.6931472
    %v294 = vlog2.pop %v286
    %v295 = vmul.f32 %v294, 0.6931472
    %v296 = vlog2.pop %v289
    %v297 = vmul.f32 %v296, 0.6931472
    %v298 = vadd.f32 %v256, %v291
    %v299 = vadd.f32 %v259, %v293
    %v300 = vadd.f32 %v262, %v295
    %v301 = vadd.f32 %v265, %v297
    %v302 = vmul.f32 %v236, %v83
    %v303 = vmul.f32 %v241, %v84
    %v304 = vmul.f32 %v246, %v85
    %v305 = vmul.f32 %v251, %v86
    %v306 = vsel %vm152, %v302, 0.0
    %307 = vadd.xlane.f32.xlu0 %v306
    %v308 = vpop.xlane.xlu0 %307
    %v309 = vsel %vm152, %v303, 0.0
    %310 = vadd.xlane.f32.xlu0 %v309
    %v311 = vpop.xlane.xlu0 %310
    %v312 = vsel %vm152, %v304, 0.0
    %313 = vadd.xlane.f32.xlu0 %v312
    %v314 = vpop.xlane.xlu0 %313
    %v315 = vsel %vm152, %v305, 0.0
    %316 = vadd.xlane.f32.xlu0 %v315
    %v317 = vpop.xlane.xlu0 %316
    %v318 = vld [vmem:[#allocation6] sm:$0x1]
    %v319 = vsub.f32 %v298, %v308
    %v320 = vsub.f32 %v299, %v311
    %v321 = vsub.f32 %v300, %v314
    %v322 = vsub.f32 %v301, %v317
    %v323 = vmul.f32 %v319, %v113
    %v324 = vmul.f32 %v320, %v114
    %v325 = vmul.f32 %v321, %v115
    %v326 = vmul.f32 %v322, %v116
    %vm327 = vcmask 7168
    %v328 = vsel %vm327, %v323, 0.0
    %v329 = vsel %vm327, %v324, 0.0
    %v330 = vadd.f32 %v328, %v329
    %v331 = vsel %vm327, %v325, 0.0
    %v332 = vadd.f32 %v330, %v331
    %v333 = vsel %vm327, %v326, 0.0
    %v334 = vadd.f32 %v332, %v333
    %335 = vadd.xlane.f32.xlu0 %v334
    %v336 = vpop.xlane.xlu0 %335
    %v337 = vrot.slane %v336, 4
    %v338 = vadd.f32 %v336, %v337
    %v339 = vrot.slane %v338, 2
    %v340 = vadd.f32 %v338, %v339
    %v341 = vrot.slane %v340, 1
    %v342 = vadd.f32 %v340, %v341
    %s343 = vtos %v342
    %v344 = vstv %s343
    %v345 = vadd.f32 %v318, %v344
    %vm346 = vcmask 0
    %347 = vst.msk [vmem:[#allocation6] sm:$0x1] %vm346, %v345
    // Predicated region
    $region26: #{tpu_custom_call.1} parent=1 // pred_check
      _
    $region27: #{tpu_custom_call.1} parent=1 // pred_check_branch
      %349 = sbr.rel (0) target = $region29
    $region28: #{tpu_custom_call.1} parent=1 // pred_region
      %s351 = ssub.s32 16, 16
      %352 = vsyncadd [#allocation5], %s351
      %s354 = sshll.u32 [#allocation6], 4
      %s355 = int_to_ptr.vmem [resolvable:$true] %s354
      %357 = dma.vmem_to_hbm [thread:$0]  %s355, 16, %s4, [#allocation5]
    $region29: #{tpu_custom_call.1} parent=1 // pred_fallthru
      _
    // Predicated region
    $region30: #{tpu_custom_call.1} parent=1 // pred_check
      _
    $region31: #{tpu_custom_call.1} parent=1 // pred_check_branch
      %359 = sbr.rel (0) target = $region33
    $region32: #{tpu_custom_call.1} parent=1 // pred_region
      %360 = dma.done [#allocation5], 16
    $region33: #{tpu_custom_call.1} parent=1 // pred_fallthru
      _
    %361 = vsyncpa [#allocation4], 1
    %362 = vsyncpa [#allocation5], 1

</llo_original>
